<compile_context>
chip_gen: v6e
topology: v6e:2x2x1
jax: 0.10.0
libtpu: 0.0.40
codegen_flags: <defaults>
</compile_context>

<pallas_src>
import functools
import math

import jax
import jax.numpy as jnp
from jax import lax
from jax.experimental import pallas as pl
from jax.experimental.pallas import tpu as pltpu


@functools.lru_cache(maxsize=1)
def _on_tpu():
    try:
        return jax.devices()[0].platform == "tpu"
    except Exception:  # pragma: no cover
        return False


def _splitmix32(x):
    """Cheap stateless 32-bit mixer (fallback RNG for non-TPU backends)."""
    x = x ^ (x >> jnp.uint32(16))
    x = x * jnp.uint32(0x7FEB352D)
    x = x ^ (x >> jnp.uint32(15))
    x = x * jnp.uint32(0x846CA68B)
    x = x ^ (x >> jnp.uint32(16))
    return x


def _pe_add_dropout_kernel(seed_ref, x_ref, pe_ref, o_ref, *,
                           p, apply_dropout, use_hw_prng):
    # x_ref : (block_s, B, D)   pe_ref : (block_s, 1, D)   o_ref : (block_s, B, D)
    # Native layout: last two dims (B, D) equal the full array dims, so the
    # BlockSpec is legal for any B/D; contiguous leading-axis slabs -> clean DMA.
    y = x_ref[...] + pe_ref[...]          # broadcast add over the batch axis

    if apply_dropout:
        if use_hw_prng:
            # Hardware PRNG: unique stream per (seed, grid step); bits come off
            # a separate path so the kernel stays memory-bound.
            pltpu.prng_seed(seed_ref[0], pl.program_id(0))
            bits = pltpu.bitcast(pltpu.prng_random_bits(y.shape), jnp.uint32)
        else:
            # Stateless counter-hash fallback (CPU / interpret mode only).
            shape = y.shape
            s = lax.broadcasted_iota(jnp.int32, shape, 0)
            b = lax.broadcasted_iota(jnp.int32, shape, 1)
            d = lax.broadcasted_iota(jnp.int32, shape, 2)
            lin = ((s * shape[1] + b) * shape[2] + d).astype(jnp.uint32)
            pid = pl.program_id(0).astype(jnp.uint32)
            key = ((seed_ref[0].astype(jnp.uint32) * jnp.uint32(0x9E3779B9))
                   ^ ((pid + jnp.uint32(1)) * jnp.uint32(0x85EBCA6B)))
            bits = _splitmix32(lin ^ key)

        # Integer-threshold compare: drop iff bits < round(p * 2^32)
        # (P(drop) off from p by at most 2^-32).
        threshold = jnp.uint32(min(int(round(p * 4294967296.0)), 4294967295))
        keep = bits >= threshold
        scale = jnp.asarray(1.0 / (1.0 - p), dtype=y.dtype)
        y = jnp.where(keep, y * scale, jnp.zeros_like(y))

    o_ref[...] = y


def make_positional_encoding_pe(d_model, max_len=5000, dtype=jnp.float32):
    """Build the (max_len, 1, d_model) pe buffer exactly as the PyTorch __init__."""
    position = jnp.arange(max_len, dtype=jnp.float32)[:, None]            # (L, 1)
    div_term = jnp.exp(jnp.arange(0, d_model, 2, dtype=jnp.float32)
                       * (-(math.log(10000.0) / d_model)))                # (D/2,)
    pe = jnp.zeros((max_len, 1, d_model), dtype=jnp.float32)
    pe = pe.at[:, 0, 0::2].set(jnp.sin(position * div_term))
    pe = pe.at[:, 0, 1::2].set(jnp.cos(position * div_term))
    return pe.astype(dtype)


def _pick_block_s(S, B, D, itemsize, target_bytes=2 << 20):
    """Rows per block: ~2 MiB x-blocks (double-buffered footprint fits v5e's
    16 MiB scoped-VMEM default and leaves headroom on v7x's 64 MiB VMEM),
    aligned to the dtype's sublane packing, and capped near S/2 so the grid has
    >= 2 steps for v7x's two TensorCores."""
    sub = 8 * max(1, 4 // max(1, itemsize))       # f32 -> 8, bf16 -> 16, int8 -> 32
    if S <= sub:
        return int(S)
    rows = target_bytes // max(1, B * D * itemsize)
    rows = max(sub, (rows // sub) * sub)
    # Cap at an (aligned) half of S so there are at least 2 grid steps.
    half = (((S + 1) // 2) + sub - 1) // sub * sub
    rows = min(rows, half, S)
    return int(rows)


def positional_encoding_forward(x, pe, *, dropout_p=0.1, training=True, seed=0,
                                block_s=None):
    """x: (S, B, D); pe: (max_len, 1, D).  Returns dropout(x + pe[:S]).

    Pass a fresh `seed` every training step so the dropout mask changes."""
    S, B, D = x.shape
    if training and dropout_p >= 1.0:              # degenerate p == 1 edge case
        return jnp.zeros_like(x)

    apply_dropout = bool(training and dropout_p > 0.0)
    pe = pe.astype(x.dtype)                         # no-op when dtypes match

    if block_s is None:
        block_s = _pick_block_s(S, B, D, x.dtype.itemsize)
    block_s = int(min(block_s, S))
    grid = (pl.cdiv(S, block_s),)

    kernel = functools.partial(
        _pe_add_dropout_kernel,
        p=float(dropout_p),
        apply_dropout=apply_dropout,
        use_hw_prng=bool(apply_dropout and _on_tpu()),
    )

    seed_arr = jnp.asarray([seed], dtype=jnp.int32)
    itemsize = x.dtype.itemsize
    cost = pl.CostEstimate(
        flops=S * B * D,
        transcendentals=0,
        bytes_accessed=(2 * S * B * D + S * D) * itemsize,   # x in + out + pe in
    )

    return pl.pallas_call(
        kernel,
        out_shape=jax.ShapeDtypeStruct((S, B, D), x.dtype),
        grid_spec=pltpu.PrefetchScalarGridSpec(
            num_scalar_prefetch=1,
            grid=grid,
            in_specs=[
                pl.BlockSpec((block_s, B, D), lambda i, seed: (i, 0, 0)),
                pl.BlockSpec((block_s, 1, D), lambda i, seed: (i, 0, 0)),
            ],
            out_specs=pl.BlockSpec((block_s, B, D), lambda i, seed: (i, 0, 0)),
        ),
        compiler_params=pltpu.CompilerParams(
            dimension_semantics=("parallel",)),    # rows independent; v7x 2-TC shard
        cost_estimate=cost,
    )(seed_arr, x, pe)


if __name__ == "__main__":
    # Small shapes consistent with the module's (seq, batch, d_model) forward.
    S, B, D = 8, 2, 32
    d_model, max_len, dropout_p = D, 5000, 0.1

    key = jax.random.PRNGKey(0)
    x = jax.random.normal(key, (S, B, D), dtype=jnp.float32)

    pe = make_positional_encoding_pe(d_model, max_len=max_len)

    # 1) Eval mode (dropout is identity) -- check numerics against plain JAX.
    y_eval = positional_encoding_forward(x, pe, dropout_p=dropout_p, training=False)
    y_eval = jax.block_until_ready(y_eval)
    ref = x + pe[:S]
    assert y_eval.shape == (S, B, D)
    assert jnp.allclose(y_eval, ref, atol=1e-6, rtol=1e-6), "eval-mode mismatch"

    # 2) Multi-block grid with a remainder block (S not a multiple of block_s).
    S2 = 20
    x2 = jax.random.normal(jax.random.PRNGKey(1), (S2, B, D), dtype=jnp.float32)
    y2 = positional_encoding_forward(x2, pe, dropout_p=dropout_p, training=False)
    y2 = jax.block_until_ready(y2)
    assert jnp.allclose(y2, x2 + pe[:S2], atol=1e-6, rtol=1e-6), "tiled/remainder mismatch"

    # 3) Train mode with in-kernel dropout (deterministic for a fixed seed).
    y_train = positional_encoding_forward(x, pe, dropout_p=dropout_p,
                                          training=True, seed=123)
    y_train = jax.block_until_ready(y_train)
    assert y_train.shape == (S, B, D)
    assert bool(jnp.all(jnp.isfinite(y_train)))
    # Every surviving element equals ref / (1 - p); dropped elements are 0.
    scaled_ref = ref / (1.0 - dropout_p)
    ok = jnp.isclose(y_train, scaled_ref, atol=1e-5) | (y_train == 0.0)
    assert bool(jnp.all(ok)), "train-mode dropout semantics mismatch"
    # Drop-rate sanity (expected ~p; extremely loose bound to avoid flakiness).
    drop_frac = float(jnp.mean((y_train == 0.0).astype(jnp.float32)))
    assert drop_frac < 0.5, f"dropout rate way off: {drop_frac}"

    print("KERNEL_OK")
</pallas_src>

<mosaic_0001>
module attributes {stable_mosaic.version = 11 : i64} {
  func.func @_pe_add_dropout_kernel(%arg0: i32, %arg1: memref<1xi32, #tpu.memory_space<smem>>, %arg2: memref<8x2x32xf32, #tpu.memory_space<vmem>>, %arg3: memref<8x1x32xf32, #tpu.memory_space<vmem>>, %arg4: memref<8x2x32xf32, #tpu.memory_space<vmem>>) attributes {dimension_semantics = [#tpu.dimension_semantics<parallel>], iteration_bounds = array<i64: 1>, scalar_prefetch = 1 : i64, scratch_operands = 0 : i64, tpu.core_type = #tpu.core_type<tc>, window_params = [{transform_indices = @transform_0, window_bounds = array<i64: 8, 2, 32>}, {transform_indices = @transform_1, window_bounds = array<i64: 8, 1, 32>}, {transform_indices = @transform_2, window_bounds = array<i64: 8, 2, 32>}]} {
    %c0 = arith.constant 0 : index
    %c0_0 = arith.constant 0 : index
    %c0_1 = arith.constant 0 : index
    %0 = vector.load %arg2[%c0, %c0_0, %c0_1] : memref<8x2x32xf32, #tpu.memory_space<vmem>>, vector<8x2x32xf32>
    %c0_2 = arith.constant 0 : index
    %c0_3 = arith.constant 0 : index
    %c0_4 = arith.constant 0 : index
    %1 = vector.load %arg3[%c0_2, %c0_3, %c0_4] : memref<8x1x32xf32, #tpu.memory_space<vmem>>, vector<8x1x32xf32>
    %2 = vector.broadcast %1 : vector<8x1x32xf32> to vector<8x2x32xf32>
    %3 = arith.addf %0, %2 : vector<8x2x32xf32>
    %c0_5 = arith.constant 0 : index
    %c0_6 = arith.constant 0 : index
    %c0_7 = arith.constant 0 : index
    %4 = vector.load %arg4[%c0_5, %c0_6, %c0_7] : memref<8x2x32xf32, #tpu.memory_space<vmem>>, vector<8x2x32xf32>
    tpu.vector_store %arg4[%c0_5, %c0_6, %c0_7], %3 {strides = array<i32>} : memref<8x2x32xf32, #tpu.memory_space<vmem>>, vector<8x2x32xf32>,
    return
  }
  func.func @transform_0(%arg0: i32, %arg1: memref<1xi32, #tpu.memory_space<smem>>) -> (i32, i32, i32) {
    %c0_i32 = arith.constant 0 : i32
    %c0_i32_0 = arith.constant 0 : i32
    %c0_i32_1 = arith.constant 0 : i32
    return %arg0, %c0_i32, %c0_i32_0 : i32, i32, i32
  }
  func.func @transform_1(%arg0: i32, %arg1: memref<1xi32, #tpu.memory_space<smem>>) -> (i32, i32, i32) {
    %c0_i32 = arith.constant 0 : i32
    %c0_i32_0 = arith.constant 0 : i32
    %c0_i32_1 = arith.constant 0 : i32
    return %arg0, %c0_i32, %c0_i32_0 : i32, i32, i32
  }
  func.func @transform_2(%arg0: i32, %arg1: memref<1xi32, #tpu.memory_space<smem>>) -> (i32, i32, i32) {
    %c0_i32 = arith.constant 0 : i32
    %c0_i32_0 = arith.constant 0 : i32
    %c0_i32_1 = arith.constant 0 : i32
    return %arg0, %c0_i32, %c0_i32_0 : i32, i32, i32
  }
}

</mosaic_0001>

<llo_original>
// kernel: tpu_custom_call.1
$region0: #{tpu_custom_call.1}
  #allocation0 [shape = 'u32[]', space=smem, size = 0x4, offset = 0x4, fixed_abs, tag = 'smem constant byte address 0x4 - core index']
  #allocation1 [shape = 'u32[144,128]{1,0:T(1,128)}', space=vmem, size = 0x12000, scoped, tag = 'internal scratch']
  #allocation2 [shape = 's32[1]{0}', space=sflag, size = 0x4, scoped, tag = 'scoped memory for tpu_custom_call.1']
  #allocation3 [shape = 's32[1]{0:T(128)S(6)}', space=smem, size = 0x200, scoped, tag = 'prefetched SMEM operand 0']
  %s0 = inlined_call_operand.<no memory space> [shape: s32[1], index: 0, kind: input, shape index: {}]
  %s1 = inlined_call_operand.vmem [shape: f32[8,2,32], index: 1, kind: input, shape index: {}]
  %s2 = inlined_call_operand.vmem [shape: f32[5000,1,32], index: 2, kind: input, shape index: {}]
  %s3 = inlined_call_operand.hbm [shape: f32[8,2,32], index: 3, kind: output, shape index: {}]
  %s4 = sld [smem:[#allocation0]]
  $region18: #{tpu_custom_call.1} parent=0
    _
  %s6 = ssub.s32 1, %s4
  %s7 = scalar_select 0, %s6, %s4
  %8 = sst [smem:[#allocation3]] %s0
  $region1: #{tpu_custom_call.1} parent=0
    #allocation4 [shape = 'u8[8192]{0}', space=vmem, size = 0x2000, scoped, tag = 'output window, operand 0, single buffered']
    #allocation5 [shape = 's32[1]{0}', space=sflag, size = 0x4, scoped, tag = 'scoped memory for tpu_custom_call.1']
    %9 = vsyncpa [#allocation5], 0
    // Predicated region
    $region2: #{tpu_custom_call.1} parent=1 // pred_check
      _
    $region3: #{tpu_custom_call.1} parent=1 // pred_check_branch
      %11 = sbr.rel (0) target = $region5
    $region4: #{tpu_custom_call.1} parent=1 // pred_region
      _
    $region5: #{tpu_custom_call.1} parent=1 // pred_fallthru
      _
    // Predicated region
    $region6: #{tpu_custom_call.1} parent=1 // pred_check
      _
    $region7: #{tpu_custom_call.1} parent=1 // pred_check_branch
      %13 = sbr.rel (0) target = $region9
    $region8: #{tpu_custom_call.1} parent=1 // pred_region
      _
    $region9: #{tpu_custom_call.1} parent=1 // pred_fallthru
      _
    %v14 = vld [vmem:[%s1] sm:$0x3]
    %v15 = vld [vmem:[%s1 + $0x2] sm:$0x3]
    %v16 = vld [vmem:[%s1 + $0x4] sm:$0x3]
    %v17 = vld [vmem:[%s1 + $0x6] sm:$0x3]
    %v18 = vld [vmem:[%s1 + $0x8] sm:$0x3]
    %v19 = vld [vmem:[%s1 + $0xa] sm:$0x3]
    %v20 = vld [vmem:[%s1 + $0xc] sm:$0x3]
    %v21 = vld [vmem:[%s1 + $0xe] sm:$0x3]
    %v22 = vld [vmem:[%s2] sm:$0x1]
    %v23 = vld [vmem:[%s2 + $0x1] sm:$0x1]
    %v24 = vld [vmem:[%s2 + $0x2] sm:$0x1]
    %v25 = vld [vmem:[%s2 + $0x3] sm:$0x1]
    %v26 = vld [vmem:[%s2 + $0x4] sm:$0x1]
    %v27 = vld [vmem:[%s2 + $0x5] sm:$0x1]
    %v28 = vld [vmem:[%s2 + $0x6] sm:$0x1]
    %v29 = vld [vmem:[%s2 + $0x7] sm:$0x1]
    %v38 = vlaneseq
    %v39 = vshrl.u32 %v38, 7
    %v40 = vsub.s32 0, %v39
    %v41 = vrot.slane %v22, %v40
    %v42 = vlaneseq
    %v43 = vshrl.u32 %v42, 7
    %v44 = vsub.s32 0, %v43
    %v45 = vrot.slane %v23, %v44
    %v46 = vlaneseq
    %v47 = vshrl.u32 %v46, 7
    %v48 = vsub.s32 0, %v47
    %v49 = vrot.slane %v24, %v48
    %v50 = vlaneseq
    %v51 = vshrl.u32 %v50, 7
    %v52 = vsub.s32 0, %v51
    %v53 = vrot.slane %v25, %v52
    %v54 = vlaneseq
    %v55 = vshrl.u32 %v54, 7
    %v56 = vsub.s32 0, %v55
    %v57 = vrot.slane %v26, %v56
    %v58 = vlaneseq
    %v59 = vshrl.u32 %v58, 7
    %v60 = vsub.s32 0, %v59
    %v61 = vrot.slane %v27, %v60
    %v62 = vlaneseq
    %v63 = vshrl.u32 %v62, 7
    %v64 = vsub.s32 0, %v63
    %v65 = vrot.slane %v28, %v64
    %v66 = vlaneseq
    %v67 = vshrl.u32 %v66, 7
    %v68 = vsub.s32 0, %v67
    %v69 = vrot.slane %v29, %v68
    %v78 = vadd.f32 %v14, %v41
    %v79 = vadd.f32 %v15, %v45
    %v80 = vadd.f32 %v16, %v49
    %v81 = vadd.f32 %v17, %v53
    %v82 = vadd.f32 %v18, %v57
    %v83 = vadd.f32 %v19, %v61
    %v84 = vadd.f32 %v20, %v65
    %v85 = vadd.f32 %v21, %v69
    %vm86 = vcmask 254976
    %87 = vst.msk [vmem:[#allocation4] sm:$0x3] %vm86, %v78
    %88 = vst.msk [vmem:[#allocation4 + $0x2] sm:$0x3] %vm86, %v79
    %89 = vst.msk [vmem:[#allocation4 + $0x4] sm:$0x3] %vm86, %v80
    %90 = vst.msk [vmem:[#allocation4 + $0x6] sm:$0x3] %vm86, %v81
    %91 = vst.msk [vmem:[#allocation4 + $0x8] sm:$0x3] %vm86, %v82
    %92 = vst.msk [vmem:[#allocation4 + $0xa] sm:$0x3] %vm86, %v83
    %93 = vst.msk [vmem:[#allocation4 + $0xc] sm:$0x3] %vm86, %v84
    %94 = vst.msk [vmem:[#allocation4 + $0xe] sm:$0x3] %vm86, %v85
    // Predicated region
    $region10: #{tpu_custom_call.1} parent=1 // pred_check
      _
    $region11: #{tpu_custom_call.1} parent=1 // pred_check_branch
      %96 = sbr.rel (0) target = $region13
    $region12: #{tpu_custom_call.1} parent=1 // pred_region
      %s98 = ssub.s32 256, 256
      %99 = vsyncadd [#allocation5], %s98
      %s100 = sshll.u32 [#allocation4], 4
      %s101 = int_to_ptr.vmem [resolvable:$true] %s100
      %106 = dma.vmem_to_hbm [thread:$0]  %s101, 256, %s3, [#allocation5], 32, 32, 2
    $region13: #{tpu_custom_call.1} parent=1 // pred_fallthru
      _
    // Predicated region
    $region14: #{tpu_custom_call.1} parent=1 // pred_check
      _
    $region15: #{tpu_custom_call.1} parent=1 // pred_check_branch
      %108 = sbr.rel (0) target = $region17
    $region16: #{tpu_custom_call.1} parent=1 // pred_region
      %109 = dma.done [#allocation5], 256
    $region17: #{tpu_custom_call.1} parent=1 // pred_fallthru
      _
    %110 = vsyncpa [#allocation5], 1

</llo_original>
